<compile_context>
chip_gen: v5e
topology: v5e:2x2
jax: 0.10.0
libtpu: 0.0.40
codegen_flags: <defaults>
</compile_context>

<pallas_src>
import jax
import jax.numpy as jnp
from jax.experimental import pallas as pl
from jax.experimental.pallas import tpu as pltpu

IN_RAW, IN_PAD = 28 * 28, 896        # 784 -> 7 * 128
H1 = 256
H2_RAW, H2_PAD = 64, 128
OUT_RAW, OUT_PAD = 10, 128


def _round_up(n, m):
    return ((n + m - 1) // m) * m


def _mlp_kernel(x_ref, w1_ref, b1_ref, w2_ref, b2_ref, w3_ref, b3_ref, o_ref):
    # x tile: (TM, 896) f32. Weights bf16 (MXU native), biases f32.
    # Zero-padded rows/cols contribute 0, so padded math == original math.
    x = x_ref[...].astype(jnp.bfloat16)

    h1 = jnp.dot(x, w1_ref[...], preferred_element_type=jnp.float32)
    h1 = jnp.maximum(h1 + b1_ref[...], 0.0)                      # ReLU(True), f32

    h2 = jnp.dot(h1.astype(jnp.bfloat16), w2_ref[...],
                 preferred_element_type=jnp.float32)
    h2 = jnp.maximum(h2 + b2_ref[...], 0.0)                      # ReLU(True), f32
    # cols 64..127 of h2 are exactly 0 (zero-padded w2/b2), so they add nothing below.

    out = jnp.dot(h2.astype(jnp.bfloat16), w3_ref[...],
                  preferred_element_type=jnp.float32)
    o_ref[...] = (out + b3_ref[...]).astype(o_ref.dtype)         # lane-dense (TM, 128) store


def _prepare_params(params):
    """Pad to lane-dense shapes and cast weights to bf16 (biases stay f32)."""
    w1 = jnp.zeros((IN_PAD, H1), jnp.bfloat16).at[:IN_RAW, :].set(
        params["w1"].astype(jnp.bfloat16))
    b1 = params["b1"].astype(jnp.float32)                                  # (1, 256)
    w2 = jnp.zeros((H1, H2_PAD), jnp.bfloat16).at[:, :H2_RAW].set(
        params["w2"].astype(jnp.bfloat16))
    b2 = jnp.zeros((1, H2_PAD), jnp.float32).at[:, :H2_RAW].set(params["b2"])
    w3 = jnp.zeros((H2_PAD, OUT_PAD), jnp.bfloat16).at[:H2_RAW, :OUT_RAW].set(
        params["w3"].astype(jnp.bfloat16))
    b3 = jnp.zeros((1, OUT_PAD), jnp.float32).at[:, :OUT_RAW].set(params["b3"])
    return w1, b1, w2, b2, w3, b3


def ae_encoder_forward(x, params):
    """x: (B, 784) float32. params: dict of pre-transposed (in, out) weights/biases."""
    B = x.shape[0]
    # Tile the batch: TM=128 matches every MXU generation; shrink for tiny batches
    # (block shapes only need sublane multiples of 8 when smaller than the array).
    TM = min(128, _round_up(B, 8))
    B_pad = _round_up(B, TM)
    grid = (B_pad // TM,)

    x_p = jnp.zeros((B_pad, IN_PAD), jnp.float32).at[:B, :IN_RAW].set(
        x.astype(jnp.float32))
    w1, b1, w2, b2, w3, b3 = _prepare_params(params)

    const = lambda i: (0, 0)   # weights/biases: same block every grid step -> stay resident
    flops = 2 * B_pad * (IN_PAD * H1 + H1 * H2_PAD + H2_PAD * OUT_PAD)
    bytes_accessed = (x_p.size * 4 + w1.size * 2 + w2.size * 2 + w3.size * 2
                      + b1.size * 4 + b2.size * 4 + b3.size * 4
                      + B_pad * OUT_PAD * 4)

    out = pl.pallas_call(
        _mlp_kernel,
        out_shape=jax.ShapeDtypeStruct((B_pad, OUT_PAD), jnp.float32),
        grid=grid,
        in_specs=[
            pl.BlockSpec((TM, IN_PAD), lambda i: (i, 0)),   # x: streamed per batch tile
            pl.BlockSpec((IN_PAD, H1), const),              # w1
            pl.BlockSpec((1, H1), const),                   # b1
            pl.BlockSpec((H1, H2_PAD), const),              # w2
            pl.BlockSpec((1, H2_PAD), const),               # b2
            pl.BlockSpec((H2_PAD, OUT_PAD), const),         # w3
            pl.BlockSpec((1, OUT_PAD), const),              # b3
        ],
        out_specs=pl.BlockSpec((TM, OUT_PAD), lambda i: (i, 0)),
        compiler_params=pltpu.CompilerParams(
            dimension_semantics=("parallel",)),
        cost_estimate=pl.CostEstimate(
            flops=flops, transcendentals=0, bytes_accessed=bytes_accessed),
    )(x_p, w1, b1, w2, b2, w3, b3)

    return out[:B, :OUT_RAW]


def init_params(key):
    """Deterministic init mirroring torch.nn.Linear's U(-1/sqrt(fan_in), +1/sqrt(fan_in)).
    Weights stored as (in, out) — the transpose of PyTorch's (out, in)."""
    dims = [(IN_RAW, H1), (H1, H2_RAW), (H2_RAW, OUT_RAW)]
    keys = jax.random.split(key, 2 * len(dims))
    params = {}
    for i, (fan_in, fan_out) in enumerate(dims):
        bound = 1.0 / jnp.sqrt(jnp.float32(fan_in))
        params[f"w{i + 1}"] = jax.random.uniform(
            keys[2 * i], (fan_in, fan_out), dtype=jnp.float32,
            minval=-bound, maxval=bound)
        params[f"b{i + 1}"] = jax.random.uniform(
            keys[2 * i + 1], (1, fan_out), dtype=jnp.float32,
            minval=-bound, maxval=bound)
    return params


def _reference_forward_f32(x, params):
    """Pure-f32 reference matching the PyTorch forward exactly."""
    h = jnp.maximum(x @ params["w1"] + params["b1"], 0.0)
    h = jnp.maximum(h @ params["w2"] + params["b2"], 0.0)
    return h @ params["w3"] + params["b3"]


def _reference_forward_matched(x, params):
    """Pure-JAX reference using the same bf16-weight / f32-accumulate path as the kernel."""
    h = jnp.dot(x.astype(jnp.bfloat16), params["w1"].astype(jnp.bfloat16),
                preferred_element_type=jnp.float32) + params["b1"]
    h = jnp.maximum(h, 0.0)
    h = jnp.dot(h.astype(jnp.bfloat16), params["w2"].astype(jnp.bfloat16),
                preferred_element_type=jnp.float32) + params["b2"]
    h = jnp.maximum(h, 0.0)
    return jnp.dot(h.astype(jnp.bfloat16), params["w3"].astype(jnp.bfloat16),
                   preferred_element_type=jnp.float32) + params["b3"]


if __name__ == "__main__":
    key = jax.random.PRNGKey(0)
    pkey, xkey = jax.random.split(key)

    params = init_params(pkey)
    B = 8
    x = jax.random.normal(xkey, (B, IN_RAW), dtype=jnp.float32)

    out = ae_encoder_forward(x, params)
    out = jax.block_until_ready(out)
    assert out.shape == (B, OUT_RAW), out.shape

    ref_matched = _reference_forward_matched(x, params)
    ref_f32 = _reference_forward_f32(x, params)
    # Tight check vs the same bf16-weight math path; loose check vs pure-f32 PyTorch math.
    assert jnp.allclose(out, ref_matched, atol=2e-3, rtol=2e-3), "mismatch vs matched ref"
    assert jnp.allclose(out, ref_f32, atol=3e-2, rtol=3e-2), "mismatch vs f32 ref"

    print("KERNEL_OK")
</pallas_src>

<mosaic_0001>
module attributes {stable_mosaic.version = 11 : i64} {
  func.func @_mlp_kernel(%arg0: i32, %arg1: memref<8x896xf32, #tpu.memory_space<vmem>>, %arg2: memref<896x256xbf16, #tpu.memory_space<vmem>>, %arg3: memref<1x256xf32, #tpu.memory_space<vmem>>, %arg4: memref<256x128xbf16, #tpu.memory_space<vmem>>, %arg5: memref<1x128xf32, #tpu.memory_space<vmem>>, %arg6: memref<128x128xbf16, #tpu.memory_space<vmem>>, %arg7: memref<1x128xf32, #tpu.memory_space<vmem>>, %arg8: memref<8x128xf32, #tpu.memory_space<vmem>>) attributes {dimension_semantics = [#tpu.dimension_semantics<parallel>], iteration_bounds = array<i64: 1>, scalar_prefetch = 0 : i64, scratch_operands = 0 : i64, tpu.core_type = #tpu.core_type<tc>, window_params = [{transform_indices = @transform_0, window_bounds = array<i64: 8, 896>}, {pipeline_mode = #tpu.pipeline_mode<synchronous>, transform_indices = @transform_1, window_bounds = array<i64: 896, 256>}, {pipeline_mode = #tpu.pipeline_mode<synchronous>, transform_indices = @transform_2, window_bounds = array<i64: 1, 256>}, {pipeline_mode = #tpu.pipeline_mode<synchronous>, transform_indices = @transform_3, window_bounds = array<i64: 256, 128>}, {pipeline_mode = #tpu.pipeline_mode<synchronous>, transform_indices = @transform_4, window_bounds = array<i64: 1, 128>}, {pipeline_mode = #tpu.pipeline_mode<synchronous>, transform_indices = @transform_5, window_bounds = array<i64: 128, 128>}, {pipeline_mode = #tpu.pipeline_mode<synchronous>, transform_indices = @transform_6, window_bounds = array<i64: 1, 128>}, {transform_indices = @transform_7, window_bounds = array<i64: 8, 128>}]} {
    %c0 = arith.constant 0 : index
    %c0_0 = arith.constant 0 : index
    %0 = vector.load %arg1[%c0, %c0_0] : memref<8x896xf32, #tpu.memory_space<vmem>>, vector<8x896xf32>
    %1 = arith.truncf %0 : vector<8x896xf32> to vector<8x896xbf16>
    %c0_1 = arith.constant 0 : index
    %c0_2 = arith.constant 0 : index
    %2 = vector.load %arg2[%c0_1, %c0_2] : memref<896x256xbf16, #tpu.memory_space<vmem>>, vector<896x256xbf16>
    %cst = arith.constant dense<0.000000e+00> : vector<8x256xf32>
    %3 = tpu.matmul %1, %2, %cst {dimension_numbers = #tpu.dot_dimension_numbers<[1], [0], [0], [1], [0, 0, 1, 1], [], []>} : vector<8x896xbf16>, vector<896x256xbf16>, vector<8x256xf32> -> vector<8x256xf32>
    %c0_3 = arith.constant 0 : index
    %c0_4 = arith.constant 0 : index
    %4 = vector.load %arg3[%c0_3, %c0_4] : memref<1x256xf32, #tpu.memory_space<vmem>>, vector<1x256xf32>
    %5 = vector.broadcast %4 : vector<1x256xf32> to vector<8x256xf32>
    %6 = arith.addf %3, %5 : vector<8x256xf32>
    %cst_5 = arith.constant 0.000000e+00 : f32
    %7 = vector.broadcast %cst_5 : f32 to vector<8x256xf32>
    %8 = arith.maximumf %6, %7 : vector<8x256xf32>
    %9 = arith.truncf %8 : vector<8x256xf32> to vector<8x256xbf16>
    %c0_6 = arith.constant 0 : index
    %c0_7 = arith.constant 0 : index
    %10 = vector.load %arg4[%c0_6, %c0_7] : memref<256x128xbf16, #tpu.memory_space<vmem>>, vector<256x128xbf16>
    %cst_8 = arith.constant dense<0.000000e+00> : vector<8x128xf32>
    %11 = tpu.matmul %9, %10, %cst_8 {dimension_numbers = #tpu.dot_dimension_numbers<[1], [0], [0], [1], [0, 0, 1, 1], [], []>} : vector<8x256xbf16>, vector<256x128xbf16>, vector<8x128xf32> -> vector<8x128xf32>
    %c0_9 = arith.constant 0 : index
    %c0_10 = arith.constant 0 : index
    %12 = vector.load %arg5[%c0_9, %c0_10] : memref<1x128xf32, #tpu.memory_space<vmem>>, vector<1x128xf32>
    %13 = vector.broadcast %12 : vector<1x128xf32> to vector<8x128xf32>
    %14 = arith.addf %11, %13 : vector<8x128xf32>
    %cst_11 = arith.constant 0.000000e+00 : f32
    %15 = vector.broadcast %cst_11 : f32 to vector<8x128xf32>
    %16 = arith.maximumf %14, %15 : vector<8x128xf32>
    %17 = arith.truncf %16 : vector<8x128xf32> to vector<8x128xbf16>
    %c0_12 = arith.constant 0 : index
    %c0_13 = arith.constant 0 : index
    %18 = vector.load %arg6[%c0_12, %c0_13] : memref<128x128xbf16, #tpu.memory_space<vmem>>, vector<128x128xbf16>
    %cst_14 = arith.constant dense<0.000000e+00> : vector<8x128xf32>
    %19 = tpu.matmul %17, %18, %cst_14 {dimension_numbers = #tpu.dot_dimension_numbers<[1], [0], [0], [1], [0, 0, 1, 1], [], []>} : vector<8x128xbf16>, vector<128x128xbf16>, vector<8x128xf32> -> vector<8x128xf32>
    %c0_15 = arith.constant 0 : index
    %c0_16 = arith.constant 0 : index
    %20 = vector.load %arg7[%c0_15, %c0_16] : memref<1x128xf32, #tpu.memory_space<vmem>>, vector<1x128xf32>
    %21 = vector.broadcast %20 : vector<1x128xf32> to vector<8x128xf32>
    %22 = arith.addf %19, %21 : vector<8x128xf32>
    %c0_17 = arith.constant 0 : index
    %c0_18 = arith.constant 0 : index
    %23 = vector.load %arg8[%c0_17, %c0_18] : memref<8x128xf32, #tpu.memory_space<vmem>>, vector<8x128xf32>
    tpu.vector_store %arg8[%c0_17, %c0_18], %22 {strides = array<i32>} : memref<8x128xf32, #tpu.memory_space<vmem>>, vector<8x128xf32>,
    return
  }
  func.func @transform_0(%arg0: i32) -> (i32, i32) {
    %c0_i32 = arith.constant 0 : i32
    %c0_i32_0 = arith.constant 0 : i32
    return %arg0, %c0_i32 : i32, i32
  }
  func.func @transform_1(%arg0: i32) -> (i32, i32) {
    %c0_i32 = arith.constant 0 : i32
    %c0_i32_0 = arith.constant 0 : i32
    %c0_i32_1 = arith.constant 0 : i32
    return %c0_i32, %c0_i32_0 : i32, i32
  }
  func.func @transform_2(%arg0: i32) -> (i32, i32) {
    %c0_i32 = arith.constant 0 : i32
    %c0_i32_0 = arith.constant 0 : i32
    %c0_i32_1 = arith.constant 0 : i32
    return %c0_i32, %c0_i32_0 : i32, i32
  }
  func.func @transform_3(%arg0: i32) -> (i32, i32) {
    %c0_i32 = arith.constant 0 : i32
    %c0_i32_0 = arith.constant 0 : i32
    %c0_i32_1 = arith.constant 0 : i32
    return %c0_i32, %c0_i32_0 : i32, i32
  }
  func.func @transform_4(%arg0: i32) -> (i32, i32) {
    %c0_i32 = arith.constant 0 : i32
    %c0_i32_0 = arith.constant 0 : i32
    %c0_i32_1 = arith.constant 0 : i32
    return %c0_i32, %c0_i32_0 : i32, i32
  }
  func.func @transform_5(%arg0: i32) -> (i32, i32) {
    %c0_i32 = arith.constant 0 : i32
    %c0_i32_0 = arith.constant 0 : i32
    %c0_i32_1 = arith.constant 0 : i32
    return %c0_i32, %c0_i32_0 : i32, i32
  }
  func.func @transform_6(%arg0: i32) -> (i32, i32) {
    %c0_i32 = arith.constant 0 : i32
    %c0_i32_0 = arith.constant 0 : i32
    %c0_i32_1 = arith.constant 0 : i32
    return %c0_i32, %c0_i32_0 : i32, i32
  }
  func.func @transform_7(%arg0: i32) -> (i32, i32) {
    %c0_i32 = arith.constant 0 : i32
    %c0_i32_0 = arith.constant 0 : i32
    return %arg0, %c0_i32 : i32, i32
  }
}

</mosaic_0001>

<llo_original>
// kernel: tpu_custom_call.1
$region0: #{tpu_custom_call.1}
  #allocation0 [shape = 'u32[]', space=smem, size = 0x4, offset = 0x4, fixed_abs, tag = 'smem constant byte address 0x4 - core index']
  #allocation1 [shape = 'u32[72,128]{1,0:T(1,128)}', space=vmem, size = 0x9000, scoped, tag = 'internal scratch']
  %s0 = inlined_call_operand.hbm [shape: f32[8,896], index: 0, kind: input, shape index: {}]
  %s1 = inlined_call_operand.hbm [shape: bf16[896,256], index: 1, kind: input, shape index: {}]
  %s2 = inlined_call_operand.hbm [shape: f32[1,256], index: 2, kind: input, shape index: {}]
  %s3 = inlined_call_operand.hbm [shape: bf16[256,128], index: 3, kind: input, shape index: {}]
  %s4 = inlined_call_operand.vmem [shape: f32[1,128], index: 4, kind: input, shape index: {}]
  %s5 = inlined_call_operand.hbm [shape: bf16[128,128], index: 5, kind: input, shape index: {}]
  %s6 = inlined_call_operand.vmem [shape: f32[1,128], index: 6, kind: input, shape index: {}]
  %s7 = inlined_call_operand.hbm [shape: f32[8,128], index: 7, kind: output, shape index: {}]
  %s8 = sld [smem:[#allocation0]]
  $region58: #{tpu_custom_call.1} parent=0
    _
  %s10 = ssub.s32 1, %s8
  %s11 = scalar_select 0, %s10, %s8
  $region1: #{tpu_custom_call.1} parent=0
    #allocation2 [shape = 'u8[28672]{0}', space=vmem, size = 0x7000, scoped, tag = 'input window, operand 0, single buffered']
    #allocation3 [shape = 's32[1]{0}', space=sflag, size = 0x4, scoped, tag = 'scoped memory for tpu_custom_call.1']
    #allocation4 [shape = 's32[1]{0}', space=sflag, size = 0x4, scoped, tag = 'scoped memory for tpu_custom_call.1']
    #allocation5 [shape = 'u8[458752]{0}', space=vmem, size = 0x70000, scoped, tag = 'input window, operand 1, single buffered']
    #allocation6 [shape = 's32[1]{0}', space=sflag, size = 0x4, scoped, tag = 'scoped memory for tpu_custom_call.1']
    #allocation7 [shape = 'u8[1024]{0}', space=vmem, size = 0x400, scoped, tag = 'input window, operand 2, single buffered']
    #allocation8 [shape = 'u8[65536]{0}', space=vmem, size = 0x10000, scoped, tag = 'input window, operand 3, single buffered']
    #allocation9 [shape = 's32[1]{0}', space=sflag, size = 0x4, scoped, tag = 'scoped memory for tpu_custom_call.1']
    #allocation10 [shape = 'u8[32768]{0}', space=vmem, size = 0x8000, scoped, tag = 'input window, operand 5, single buffered']
    #allocation11 [shape = 'u8[4096]{0}', space=vmem, size = 0x1000, scoped, tag = 'output window, operand 0, single buffered']
    %12 = vsyncpa [#allocation3], 0
    %13 = vsyncpa [#allocation6], 0
    %14 = vsyncpa [#allocation9], 0
    %15 = vsyncpa [#allocation4], 0
    // Predicated region
    $region2: #{tpu_custom_call.1} parent=1 // pred_check
      _
    $region3: #{tpu_custom_call.1} parent=1 // pred_check_branch
      %17 = sbr.rel (0) target = $region5
    $region4: #{tpu_custom_call.1} parent=1 // pred_region
      %19 = vsyncadd [#allocation3], 0
      %s21 = sshll.u32 %s0, 4
      %s22 = int_to_ptr.hbm [resolvable:$true] %s21
      %s23 = sshll.u32 [#allocation2], 4
      %s24 = int_to_ptr.vmem [resolvable:$true] %s23
      %26 = dma.hbm_to_vmem [thread:$0]  %s22, 896, %s24, [#allocation3]
    $region5: #{tpu_custom_call.1} parent=1 // pred_fallthru
      _
    // Predicated region
    $region6: #{tpu_custom_call.1} parent=1 // pred_check
      _
    $region7: #{tpu_custom_call.1} parent=1 // pred_check_branch
      %28 = sbr.rel (0) target = $region9
    $region8: #{tpu_custom_call.1} parent=1 // pred_region
      %30 = vsyncadd [#allocation6], 0
      %s31 = sshll.u32 %s1, 4
      %s32 = int_to_ptr.hbm [resolvable:$true] %s31
      %s33 = sshll.u32 [#allocation5], 4
      %s34 = int_to_ptr.vmem [resolvable:$true] %s33
      %39 = dma.hbm_to_vmem [thread:$0]  %s32, 14336, %s34, [#allocation6], 128, 128, 8
    $region9: #{tpu_custom_call.1} parent=1 // pred_fallthru
      _
    // Predicated region
    $region10: #{tpu_custom_call.1} parent=1 // pred_check
      _
    $region11: #{tpu_custom_call.1} parent=1 // pred_check_branch
      %41 = sbr.rel (0) target = $region13
    $region12: #{tpu_custom_call.1} parent=1 // pred_region
      %43 = vsyncadd [#allocation6], 0
      %s45 = sshll.u32 %s2, 4
      %s46 = int_to_ptr.hbm [resolvable:$true] %s45
      %s47 = sshll.u32 [#allocation7], 4
      %s48 = int_to_ptr.vmem [resolvable:$true] %s47
      %50 = dma.hbm_to_vmem [thread:$0]  %s46, 32, %s48, [#allocation6]
    $region13: #{tpu_custom_call.1} parent=1 // pred_fallthru
      _
    // Predicated region
    $region14: #{tpu_custom_call.1} parent=1 // pred_check
      _
    $region15: #{tpu_custom_call.1} parent=1 // pred_check_branch
      %52 = sbr.rel (0) target = $region17
    $region16: #{tpu_custom_call.1} parent=1 // pred_region
      %54 = vsyncadd [#allocation9], 0
      %s55 = sshll.u32 %s3, 4
      %s56 = int_to_ptr.hbm [resolvable:$true] %s55
      %s57 = sshll.u32 [#allocation8], 4
      %s58 = int_to_ptr.vmem [resolvable:$true] %s57
      %63 = dma.hbm_to_vmem [thread:$0]  %s56, 2048, %s58, [#allocation9], 64, 64, 4
    $region17: #{tpu_custom_call.1} parent=1 // pred_fallthru
      _
    // Predicated region
    $region18: #{tpu_custom_call.1} parent=1 // pred_check
      _
    $region19: #{tpu_custom_call.1} parent=1 // pred_check_branch
      %65 = sbr.rel (0) target = $region21
    $region20: #{tpu_custom_call.1} parent=1 // pred_region
      _
    $region21: #{tpu_custom_call.1} parent=1 // pred_fallthru
      _
    // Predicated region
    $region22: #{tpu_custom_call.1} parent=1 // pred_check
      _
    $region23: #{tpu_custom_call.1} parent=1 // pred_check_branch
      %67 = sbr.rel (0) target = $region25
    $region24: #{tpu_custom_call.1} parent=1 // pred_region
      %69 = vsyncadd [#allocation9], 0
      %s70 = sshll.u32 %s5, 4
      %s71 = int_to_ptr.hbm [resolvable:$true] %s70
      %s72 = sshll.u32 [#allocation10], 4
      %s73 = int_to_ptr.vmem [resolvable:$true] %s72
      %78 = dma.hbm_to_vmem [thread:$0]  %s71, 1024, %s73, [#allocation9], 64, 64, 4
    $region25: #{tpu_custom_call.1} parent=1 // pred_fallthru
      _
    // Predicated region
    $region26: #{tpu_custom_call.1} parent=1 // pred_check
      _
    $region27: #{tpu_custom_call.1} parent=1 // pred_check_branch
      %80 = sbr.rel (0) target = $region29
    $region28: #{tpu_custom_call.1} parent=1 // pred_region
      _
    $region29: #{tpu_custom_call.1} parent=1 // pred_fallthru
      _
    // Predicated region
    $region30: #{tpu_custom_call.1} parent=1 // pred_check
      _
    $region31: #{tpu_custom_call.1} parent=1 // pred_check_branch
      %82 = sbr.rel (0) target = $region33
    $region32: #{tpu_custom_call.1} parent=1 // pred_region
      %84 = dma.done [#allocation3], 896
    $region33: #{tpu_custom_call.1} parent=1 // pred_fallthru
      _
    // Predicated region
    $region34: #{tpu_custom_call.1} parent=1 // pred_check
      _
    $region35: #{tpu_custom_call.1} parent=1 // pred_check_branch
      %86 = sbr.rel (0) target = $region37
    $region36: #{tpu_custom_call.1} parent=1 // pred_region
      %88 = dma.done [#allocation6], 14336
    $region37: #{tpu_custom_call.1} parent=1 // pred_fallthru
      _
    // Predicated region
    $region38: #{tpu_custom_call.1} parent=1 // pred_check
      _
    $region39: #{tpu_custom_call.1} parent=1 // pred_check_branch
      %90 = sbr.rel (0) target = $region41
    $region40: #{tpu_custom_call.1} parent=1 // pred_region
      %92 = dma.done [#allocation6], 32
    $region41: #{tpu_custom_call.1} parent=1 // pred_fallthru
      _
    // Predicated region
    $region42: #{tpu_custom_call.1} parent=1 // pred_check
      _
    $region43: #{tpu_custom_call.1} parent=1 // pred_check_branch
      %94 = sbr.rel (0) target = $region45
    $region44: #{tpu_custom_call.1} parent=1 // pred_region
      %96 = dma.done [#allocation9], 2048
    $region45: #{tpu_custom_call.1} parent=1 // pred_fallthru
      _
    // Predicated region
    $region46: #{tpu_custom_call.1} parent=1 // pred_check
      _
    $region47: #{tpu_custom_call.1} parent=1 // pred_check_branch
      %98 = sbr.rel (0) target = $region49
    $region48: #{tpu_custom_call.1} parent=1 // pred_region
      %100 = dma.done [#allocation9], 1024
    $region49: #{tpu_custom_call.1} parent=1 // pred_fallthru
      _
    %v101 = vld [vmem:[#allocation2] sm:$0xff]
    %v102 = vld [vmem:[#allocation2 + $0x8] sm:$0xff]
    %v103 = vld [vmem:[#allocation2 + $0x10] sm:$0xff]
    %v104 = vld [vmem:[#allocation2 + $0x18] sm:$0xff]
    %v105 = vld [vmem:[#allocation2 + $0x20] sm:$0xff]
    %v106 = vld [vmem:[#allocation2 + $0x28] sm:$0xff]
    %v107 = vld [vmem:[#allocation2 + $0x30] sm:$0xff]
    %v108 = vpack.c.bf16 %v101, %v101
    %v109 = vpack.c.bf16 %v102, %v102
    %v110 = vpack.c.bf16 %v103, %v103
    %v111 = vpack.c.bf16 %v104, %v104
    %v112 = vpack.c.bf16 %v105, %v105
    %v113 = vpack.c.bf16 %v106, %v106
    %v114 = vpack.c.bf16 %v107, %v107
    %v115 = vld [vmem:[#allocation5] sm:$0xff]
    %v116 = vld [vmem:[#allocation5 + $0x8] sm:$0xff]
    %v117 = vld [vmem:[#allocation5 + $0x10] sm:$0xff]
    %v118 = vld [vmem:[#allocation5 + $0x18] sm:$0xff]
    %v119 = vld [vmem:[#allocation5 + $0x20] sm:$0xff]
    %v120 = vld [vmem:[#allocation5 + $0x28] sm:$0xff]
    %v121 = vld [vmem:[#allocation5 + $0x30] sm:$0xff]
    %v122 = vld [vmem:[#allocation5 + $0x38] sm:$0xff]
    %v123 = vld [vmem:[#allocation5 + $0x40] sm:$0xff]
    %v124 = vld [vmem:[#allocation5 + $0x48] sm:$0xff]
    %v125 = vld [vmem:[#allocation5 + $0x50] sm:$0xff]
    %v126 = vld [vmem:[#allocation5 + $0x58] sm:$0xff]
    %v127 = vld [vmem:[#allocation5 + $0x60] sm:$0xff]
    %v128 = vld [vmem:[#allocation5 + $0x68] sm:$0xff]
    %v129 = vld [vmem:[#allocation5 + $0x70] sm:$0xff]
    %v130 = vld [vmem:[#allocation5 + $0x78] sm:$0xff]
    %v131 = vld [vmem:[#allocation5 + $0x80] sm:$0xff]
    %v132 = vld [vmem:[#allocation5 + $0x88] sm:$0xff]
    %v133 = vld [vmem:[#allocation5 + $0x90] sm:$0xff]
    %v134 = vld [vmem:[#allocation5 + $0x98] sm:$0xff]
    %v135 = vld [vmem:[#allocation5 + $0xa0] sm:$0xff]
    %v136 = vld [vmem:[#allocation5 + $0xa8] sm:$0xff]
    %v137 = vld [vmem:[#allocation5 + $0xb0] sm:$0xff]
    %v138 = vld [vmem:[#allocation5 + $0xb8] sm:$0xff]
    %v139 = vld [vmem:[#allocation5 + $0xc0] sm:$0xff]
    %v140 = vld [vmem:[#allocation5 + $0xc8] sm:$0xff]
    %v141 = vld [vmem:[#allocation5 + $0xd0] sm:$0xff]
    %v142 = vld [vmem:[#allocation5 + $0xd8] sm:$0xff]
    %v143 = vld [vmem:[#allocation5 + $0xe0] sm:$0xff]
    %v144 = vld [vmem:[#allocation5 + $0xe8] sm:$0xff]
    %v145 = vld [vmem:[#allocation5 + $0xf0] sm:$0xff]
    %v146 = vld [vmem:[#allocation5 + $0xf8] sm:$0xff]
    %v147 = vld [vmem:[#allocation5 + $0x100] sm:$0xff]
    %v148 = vld [vmem:[#allocation5 + $0x108] sm:$0xff]
    %v149 = vld [vmem:[#allocation5 + $0x110] sm:$0xff]
    %v150 = vld [vmem:[#allocation5 + $0x118] sm:$0xff]
    %v151 = vld [vmem:[#allocation5 + $0x120] sm:$0xff]
    %v152 = vld [vmem:[#allocation5 + $0x128] sm:$0xff]
    %v153 = vld [vmem:[#allocation5 + $0x130] sm:$0xff]
    %v154 = vld [vmem:[#allocation5 + $0x138] sm:$0xff]
    %v155 = vld [vmem:[#allocation5 + $0x140] sm:$0xff]
    %v156 = vld [vmem:[#allocation5 + $0x148] sm:$0xff]
    %v157 = vld [vmem:[#allocation5 + $0x150] sm:$0xff]
    %v158 = vld [vmem:[#allocation5 + $0x158] sm:$0xff]
    %v159 = vld [vmem:[#allocation5 + $0x160] sm:$0xff]
    %v160 = vld [vmem:[#allocation5 + $0x168] sm:$0xff]
    %v161 = vld [vmem:[#allocation5 + $0x170] sm:$0xff]
    %v162 = vld [vmem:[#allocation5 + $0x178] sm:$0xff]
    %v163 = vld [vmem:[#allocation5 + $0x180] sm:$0xff]
    %v164 = vld [vmem:[#allocation5 + $0x188] sm:$0xff]
    %v165 = vld [vmem:[#allocation5 + $0x190] sm:$0xff]
    %v166 = vld [vmem:[#allocation5 + $0x198] sm:$0xff]
    %v167 = vld [vmem:[#allocation5 + $0x1a0] sm:$0xff]
    %v168 = vld [vmem:[#allocation5 + $0x1a8] sm:$0xff]
    %v169 = vld [vmem:[#allocation5 + $0x1b0] sm:$0xff]
    %v170 = vld [vmem:[#allocation5 + $0x1b8] sm:$0xff]
    %v171 = vld [vmem:[#allocation5 + $0x1c0] sm:$0xff]
    %v172 = vld [vmem:[#allocation5 + $0x1c8] sm:$0xff]
    %v173 = vld [vmem:[#allocation5 + $0x1d0] sm:$0xff]
    %v174 = vld [vmem:[#allocation5 + $0x1d8] sm:$0xff]
    %v175 = vld [vmem:[#allocation5 + $0x1e0] sm:$0xff]
    %v176 = vld [vmem:[#allocation5 + $0x1e8] sm:$0xff]
    %v177 = vld [vmem:[#allocation5 + $0x1f0] sm:$0xff]
    %v178 = vld [vmem:[#allocation5 + $0x1f8] sm:$0xff]
    %v179 = vld [vmem:[#allocation5 + $0x200] sm:$0xff]
    %v180 = vld [vmem:[#allocation5 + $0x208] sm:$0xff]
    %v181 = vld [vmem:[#allocation5 + $0x210] sm:$0xff]
    %v182 = vld [vmem:[#allocation5 + $0x218] sm:$0xff]
    %v183 = vld [vmem:[#allocation5 + $0x220] sm:$0xff]
    %v184 = vld [vmem:[#allocation5 + $0x228] sm:$0xff]
    %v185 = vld [vmem:[#allocation5 + $0x230] sm:$0xff]
    %v186 = vld [vmem:[#allocation5 + $0x238] sm:$0xff]
    %v187 = vld [vmem:[#allocation5 + $0x240] sm:$0xff]
    %v188 = vld [vmem:[#allocation5 + $0x248] sm:$0xff]
    %v189 = vld [vmem:[#allocation5 + $0x250] sm:$0xff]
    %v190 = vld [vmem:[#allocation5 + $0x258] sm:$0xff]
    %v191 = vld [vmem:[#allocation5 + $0x260] sm:$0xff]
    %v192 = vld [vmem:[#allocation5 + $0x268] sm:$0xff]
    %v193 = vld [vmem:[#allocation5 + $0x270] sm:$0xff]
    %v194 = vld [vmem:[#allocation5 + $0x278] sm:$0xff]
    %v195 = vld [vmem:[#allocation5 + $0x280] sm:$0xff]
    %v196 = vld [vmem:[#allocation5 + $0x288] sm:$0xff]
    %v197 = vld [vmem:[#allocation5 + $0x290] sm:$0xff]
    %v198 = vld [vmem:[#allocation5 + $0x298] sm:$0xff]
    %v199 = vld [vmem:[#allocation5 + $0x2a0] sm:$0xff]
    %v200 = vld [vmem:[#allocation5 + $0x2a8] sm:$0xff]
    %v201 = vld [vmem:[#allocation5 + $0x2b0] sm:$0xff]
    %v202 = vld [vmem:[#allocation5 + $0x2b8] sm:$0xff]
    %v203 = vld [vmem:[#allocation5 + $0x2c0] sm:$0xff]
    %v204 = vld [vmem:[#allocation5 + $0x2c8] sm:$0xff]
    %v205 = vld [vmem:[#allocation5 + $0x2d0] sm:$0xff]
    %v206 = vld [vmem:[#allocation5 + $0x2d8] sm:$0xff]
    %v207 = vld [vmem:[#allocation5 + $0x2e0] sm:$0xff]
    %v208 = vld [vmem:[#allocation5 + $0x2e8] sm:$0xff]
    %v209 = vld [vmem:[#allocation5 + $0x2f0] sm:$0xff]
    %v210 = vld [vmem:[#allocation5 + $0x2f8] sm:$0xff]
    %v211 = vld [vmem:[#allocation5 + $0x300] sm:$0xff]
    %v212 = vld [vmem:[#allocation5 + $0x308] sm:$0xff]
    %v213 = vld [vmem:[#allocation5 + $0x310] sm:$0xff]
    %v214 = vld [vmem:[#allocation5 + $0x318] sm:$0xff]
    %v215 = vld [vmem:[#allocation5 + $0x320] sm:$0xff]
    %v216 = vld [vmem:[#allocation5 + $0x328] sm:$0xff]
    %v217 = vld [vmem:[#allocation5 + $0x330] sm:$0xff]
    %v218 = vld [vmem:[#allocation5 + $0x338] sm:$0xff]
    %v219 = vld [vmem:[#allocation5 + $0x340] sm:$0xff]
    %v220 = vld [vmem:[#allocation5 + $0x348] sm:$0xff]
    %v221 = vld [vmem:[#allocation5 + $0x350] sm:$0xff]
    %v222 = vld [vmem:[#allocation5 + $0x358] sm:$0xff]
    %v223 = vld [vmem:[#allocation5 + $0x360] sm:$0xff]
    %v224 = vld [vmem:[#allocation5 + $0x368] sm:$0xff]
    %v225 = vld [vmem:[#allocation5 + $0x370] sm:$0xff]
    %v226 = vld [vmem:[#allocation5 + $0x378] sm:$0xff]
    %v227 = vld [vmem:[#allocation7] sm:$0x3]
    %v229 = vperm.slane %v227, 0
    %v230 = vperm.slane %v227, 1
    %v345 = vunpack.c.l.b16 %v115
    %v346 = vunpack.c.h.b16 %v115
    %v347 = vunpack.c.l.b16 %v116
    %v348 = vunpack.c.h.b16 %v116
    %v349 = vunpack.c.l.b16 %v117
    %v350 = vunpack.c.h.b16 %v117
    %v351 = vunpack.c.l.b16 %v118
    %v352 = vunpack.c.h.b16 %v118
    %v353 = vunpack.c.l.b16 %v119
    %v354 = vunpack.c.h.b16 %v119
    %v355 = vunpack.c.l.b16 %v120
    %v356 = vunpack.c.h.b16 %v120
    %v357 = vunpack.c.l.b16 %v121
    %v358 = vunpack.c.h.b16 %v121
    %v359 = vunpack.c.l.b16 %v122
    %v360 = vunpack.c.h.b16 %v122
    %v361 = vunpack.c.l.b16 %v123
    %v362 = vunpack.c.h.b16 %v123
    %v363 = vunpack.c.l.b16 %v124
    %v364 = vunpack.c.h.b16 %v124
    %v365 = vunpack.c.l.b16 %v125
    %v366 = vunpack.c.h.b16 %v125
    %v367 = vunpack.c.l.b16 %v126
    %v368 = vunpack.c.h.b16 %v126
    %v369 = vunpack.c.l.b16 %v127
    %v370 = vunpack.c.h.b16 %v127
    %v371 = vunpack.c.l.b16 %v128
    %v372 = vunpack.c.h.b16 %v128
    %v373 = vunpack.c.l.b16 %v129
    %v374 = vunpack.c.h.b16 %v129
    %v375 = vunpack.c.l.b16 %v130
    %v376 = vunpack.c.h.b16 %v130
    %v377 = vunpack.c.l.b16 %v131
    %v378 = vunpack.c.h.b16 %v131
    %v379 = vunpack.c.l.b16 %v132
    %v380 = vunpack.c.h.b16 %v132
    %v381 = vunpack.c.l.b16 %v133
    %v382 = vunpack.c.h.b16 %v133
    %v383 = vunpack.c.l.b16 %v134
    %v384 = vunpack.c.h.b16 %v134
    %v385 = vunpack.c.l.b16 %v135
    %v386 = vunpack.c.h.b16 %v135
    %v387 = vunpack.c.l.b16 %v136
    %v388 = vunpack.c.h.b16 %v136
    %v389 = vunpack.c.l.b16 %v137
    %v390 = vunpack.c.h.b16 %v137
    %v391 = vunpack.c.l.b16 %v138
    %v392 = vunpack.c.h.b16 %v138
    %v393 = vunpack.c.l.b16 %v139
    %v394 = vunpack.c.h.b16 %v139
    %v395 = vunpack.c.l.b16 %v140
    %v396 = vunpack.c.h.b16 %v140
    %v397 = vunpack.c.l.b16 %v141
    %v398 = vunpack.c.h.b16 %v141
    %v399 = vunpack.c.l.b16 %v142
    %v400 = vunpack.c.h.b16 %v142
    %v401 = vunpack.c.l.b16 %v143
    %v402 = vunpack.c.h.b16 %v143
    %v403 = vunpack.c.l.b16 %v144
    %v404 = vunpack.c.h.b16 %v144
    %v405 = vunpack.c.l.b16 %v145
    %v406 = vunpack.c.h.b16 %v145
    %v407 = vunpack.c.l.b16 %v146
    %v408 = vunpack.c.h.b16 %v146
    %v409 = vunpack.c.l.b16 %v147
    %v410 = vunpack.c.h.b16 %v147
    %v411 = vunpack.c.l.b16 %v148
    %v412 = vunpack.c.h.b16 %v148
    %v413 = vunpack.c.l.b16 %v149
    %v414 = vunpack.c.h.b16 %v149
    %v415 = vunpack.c.l.b16 %v150
    %v416 = vunpack.c.h.b16 %v150
    %v417 = vunpack.c.l.b16 %v151
    %v418 = vunpack.c.h.b16 %v151
    %v419 = vunpack.c.l.b16 %v152
    %v420 = vunpack.c.h.b16 %v152
    %v421 = vunpack.c.l.b16 %v153
    %v422 = vunpack.c.h.b16 %v153
    %v423 = vunpack.c.l.b16 %v154
    %v424 = vunpack.c.h.b16 %v154
    %v425 = vunpack.c.l.b16 %v155
    %v426 = vunpack.c.h.b16 %v155
    %v427 = vunpack.c.l.b16 %v156
    %v428 = vunpack.c.h.b16 %v156
    %v429 = vunpack.c.l.b16 %v157
    %v430 = vunpack.c.h.b16 %v157
    %v431 = vunpack.c.l.b16 %v158
    %v432 = vunpack.c.h.b16 %v158
    %v433 = vunpack.c.l.b16 %v159
    %v434 = vunpack.c.h.b16 %v159
    %v435 = vunpack.c.l.b16 %v160
    %v436 = vunpack.c.h.b16 %v160
    %v437 = vunpack.c.l.b16 %v161
    %v438 = vunpack.c.h.b16 %v161
    %v439 = vunpack.c.l.b16 %v162
    %v440 = vunpack.c.h.b16 %v162
    %v441 = vunpack.c.l.b16 %v163
    %v442 = vunpack.c.h.b16 %v163
    %v443 = vunpack.c.l.b16 %v164
    %v444 = vunpack.c.h.b16 %v164
    %v445 = vunpack.c.l.b16 %v165
    %v446 = vunpack.c.h.b16 %v165
    %v447 = vunpack.c.l.b16 %v166
    %v448 = vunpack.c.h.b16 %v166
    %v449 = vunpack.c.l.b16 %v167
    %v450 = vunpack.c.h.b16 %v167
    %v451 = vunpack.c.l.b16 %v168
    %v452 = vunpack.c.h.b16 %v168
    %v453 = vunpack.c.l.b16 %v169
    %v454 = vunpack.c.h.b16 %v169
    %v455 = vunpack.c.l.b16 %v170
    %v456 = vunpack.c.h.b16 %v170
    %v457 = vunpack.c.l.b16 %v171
    %v458 = vunpack.c.h.b16 %v171
    %v459 = vunpack.c.l.b16 %v172
    %v460 = vunpack.c.h.b16 %v172
    %v461 = vunpack.c.l.b16 %v173
    %v462 = vunpack.c.h.b16 %v173
    %v463 = vunpack.c.l.b16 %v174
    %v464 = vunpack.c.h.b16 %v174
    %v465 = vunpack.c.l.b16 %v175
    %v466 = vunpack.c.h.b16 %v175
    %v467 = vunpack.c.l.b16 %v176
    %v468 = vunpack.c.h.b16 %v176
    %v469 = vunpack.c.l.b16 %v177
    %v470 = vunpack.c.h.b16 %v177
    %v471 = vunpack.c.l.b16 %v178
    %v472 = vunpack.c.h.b16 %v178
    %v473 = vunpack.c.l.b16 %v179
    %v474 = vunpack.c.h.b16 %v179
    %v475 = vunpack.c.l.b16 %v180
    %v476 = vunpack.c.h.b16 %v180
    %v477 = vunpack.c.l.b16 %v181
    %v478 = vunpack.c.h.b16 %v181
    %v479 = vunpack.c.l.b16 %v182
    %v480 = vunpack.c.h.b16 %v182
    %v481 = vunpack.c.l.b16 %v183
    %v482 = vunpack.c.h.b16 %v183
    %v483 = vunpack.c.l.b16 %v184
    %v484 = vunpack.c.h.b16 %v184
    %v485 = vunpack.c.l.b16 %v185
    %v486 = vunpack.c.h.b16 %v185
    %v487 = vunpack.c.l.b16 %v186
    %v488 = vunpack.c.h.b16 %v186
    %v489 = vunpack.c.l.b16 %v187
    %v490 = vunpack.c.h.b16 %v187
    %v491 = vunpack.c.l.b16 %v188
    %v492 = vunpack.c.h.b16 %v188
    %v493 = vunpack.c.l.b16 %v189
    %v494 = vunpack.c.h.b16 %v189
    %v495 = vunpack.c.l.b16 %v190
    %v496 = vunpack.c.h.b16 %v190
    %v497 = vunpack.c.l.b16 %v191
    %v498 = vunpack.c.h.b16 %v191
    %v499 = vunpack.c.l.b16 %v192
    %v500 = vunpack.c.h.b16 %v192
    %v501 = vunpack.c.l.b16 %v193
    %v502 = vunpack.c.h.b16 %v193
    %v503 = vunpack.c.l.b16 %v194
    %v504 = vunpack.c.h.b16 %v194
    %v505 = vunpack.c.l.b16 %v195
    %v506 = vunpack.c.h.b16 %v195
    %v507 = vunpack.c.l.b16 %v196
    %v508 = vunpack.c.h.b16 %v196
    %v509 = vunpack.c.l.b16 %v197
    %v510 = vunpack.c.h.b16 %v197
    %v511 = vunpack.c.l.b16 %v198
    %v512 = vunpack.c.h.b16 %v198
    %v513 = vunpack.c.l.b16 %v199
    %v514 = vunpack.c.h.b16 %v199
    %v515 = vunpack.c.l.b16 %v200
    %v516 = vunpack.c.h.b16 %v200
    %v517 = vunpack.c.l.b16 %v201
    %v518 = vunpack.c.h.b16 %v201
    %v519 = vunpack.c.l.b16 %v202
    %v520 = vunpack.c.h.b16 %v202
    %v521 = vunpack.c.l.b16 %v203
    %v522 = vunpack.c.h.b16 %v203
    %v523 = vunpack.c.l.b16 %v204
    %v524 = vunpack.c.h.b16 %v204
    %v525 = vunpack.c.l.b16 %v205
    %v526 = vunpack.c.h.b16 %v205
    %v527 = vunpack.c.l.b16 %v206
    %v528 = vunpack.c.h.b16 %v206
    %v529 = vunpack.c.l.b16 %v207
    %v530 = vunpack.c.h.b16 %v207
    %v531 = vunpack.c.l.b16 %v208
    %v532 = vunpack.c.h.b16 %v208
    %v533 = vunpack.c.l.b16 %v209
    %v534 = vunpack.c.h.b16 %v209
    %v535 = vunpack.c.l.b16 %v210
    %v536 = vunpack.c.h.b16 %v210
    %v537 = vunpack.c.l.b16 %v211
    %v538 = vunpack.c.h.b16 %v211
    %v539 = vunpack.c.l.b16 %v212
    %v540 = vunpack.c.h.b16 %v212
    %v541 = vunpack.c.l.b16 %v213
    %v542 = vunpack.c.h.b16 %v213
    %v543 = vunpack.c.l.b16 %v214
    %v544 = vunpack.c.h.b16 %v214
    %v545 = vunpack.c.l.b16 %v215
    %v546 = vunpack.c.h.b16 %v215
    %v547 = vunpack.c.l.b16 %v216
    %v548 = vunpack.c.h.b16 %v216
    %v549 = vunpack.c.l.b16 %v217
    %v550 = vunpack.c.h.b16 %v217
    %v551 = vunpack.c.l.b16 %v218
    %v552 = vunpack.c.h.b16 %v218
    %v553 = vunpack.c.l.b16 %v219
    %v554 = vunpack.c.h.b16 %v219
    %v555 = vunpack.c.l.b16 %v220
    %v556 = vunpack.c.h.b16 %v220
    %v557 = vunpack.c.l.b16 %v221
    %v558 = vunpack.c.h.b16 %v221
    %v559 = vunpack.c.l.b16 %v222
    %v560 = vunpack.c.h.b16 %v222
    %v561 = vunpack.c.l.b16 %v223
    %v562 = vunpack.c.h.b16 %v223
    %v563 = vunpack.c.l.b16 %v224
    %v564 = vunpack.c.h.b16 %v224
    %v565 = vunpack.c.l.b16 %v225
    %v566 = vunpack.c.h.b16 %v225
    %v567 = vunpack.c.l.b16 %v226
    %v568 = vunpack.c.h.b16 %v226
    %v569 = vpack.c.b16 %v347, %v345
    %v570 = vpack.c.b16 %v348, %v346
    %v571 = vpack.c.b16 %v351, %v349
    %v572 = vpack.c.b16 %v352, %v350
    %v573 = vpack.c.b16 %v355, %v353
    %v574 = vpack.c.b16 %v356, %v354
    %v575 = vpack.c.b16 %v359, %v357
    %v576 = vpack.c.b16 %v360, %v358
    %v577 = vpack.c.b16 %v363, %v361
    %v578 = vpack.c.b16 %v364, %v362
    %v579 = vpack.c.b16 %v367, %v365
    %v580 = vpack.c.b16 %v368, %v366
    %v581 = vpack.c.b16 %v371, %v369
    %v582 = vpack.c.b16 %v372, %v370
    %v583 = vpack.c.b16 %v375, %v373
    %v584 = vpack.c.b16 %v376, %v374
    %v585 = vpack.c.b16 %v379, %v377
    %v586 = vpack.c.b16 %v380, %v378
    %v587 = vpack.c.b16 %v383, %v381
    %v588 = vpack.c.b16 %v384, %v382
    %v589 = vpack.c.b16 %v387, %v385
    %v590 = vpack.c.b16 %v388, %v386
    %v591 = vpack.c.b16 %v391, %v389
    %v592 = vpack.c.b16 %v392, %v390
    %v593 = vpack.c.b16 %v395, %v393
    %v594 = vpack.c.b16 %v396, %v394
    %v595 = vpack.c.b16 %v399, %v397
    %v596 = vpack.c.b16 %v400, %v398
    %v597 = vpack.c.b16 %v403, %v401
    %v598 = vpack.c.b16 %v404, %v402
    %v599 = vpack.c.b16 %v407, %v405
    %v600 = vpack.c.b16 %v408, %v406
    %v601 = vpack.c.b16 %v411, %v409
    %v602 = vpack.c.b16 %v412, %v410
    %v603 = vpack.c.b16 %v415, %v413
    %v604 = vpack.c.b16 %v416, %v414
    %v605 = vpack.c.b16 %v419, %v417
    %v606 = vpack.c.b16 %v420, %v418
    %v607 = vpack.c.b16 %v423, %v421
    %v608 = vpack.c.b16 %v424, %v422
    %v609 = vpack.c.b16 %v427, %v425
    %v610 = vpack.c.b16 %v428, %v426
    %v611 = vpack.c.b16 %v431, %v429
    %v612 = vpack.c.b16 %v432, %v430
    %v613 = vpack.c.b16 %v435, %v433
    %v614 = vpack.c.b16 %v436, %v434
    %v615 = vpack.c.b16 %v439, %v437
    %v616 = vpack.c.b16 %v440, %v438
    %v617 = vpack.c.b16 %v443, %v441
    %v618 = vpack.c.b16 %v444, %v442
    %v619 = vpack.c.b16 %v447, %v445
    %v620 = vpack.c.b16 %v448, %v446
    %v621 = vpack.c.b16 %v451, %v449
    %v622 = vpack.c.b16 %v452, %v450
    %v623 = vpack.c.b16 %v455, %v453
    %v624 = vpack.c.b16 %v456, %v454
    %v625 = vpack.c.b16 %v459, %v457
    %v626 = vpack.c.b16 %v460, %v458
    %v627 = vpack.c.b16 %v463, %v461
    %v628 = vpack.c.b16 %v464, %v462
    %v629 = vpack.c.b16 %v467, %v465
    %v630 = vpack.c.b16 %v468, %v466
    %v631 = vpack.c.b16 %v471, %v469
    %v632 = vpack.c.b16 %v472, %v470
    %v633 = vpack.c.b16 %v475, %v473
    %v634 = vpack.c.b16 %v476, %v474
    %v635 = vpack.c.b16 %v479, %v477
    %v636 = vpack.c.b16 %v480, %v478
    %v637 = vpack.c.b16 %v483, %v481
    %v638 = vpack.c.b16 %v484, %v482
    %v639 = vpack.c.b16 %v487, %v485
    %v640 = vpack.c.b16 %v488, %v486
    %v641 = vpack.c.b16 %v491, %v489
    %v642 = vpack.c.b16 %v492, %v490
    %v643 = vpack.c.b16 %v495, %v493
    %v644 = vpack.c.b16 %v496, %v494
    %v645 = vpack.c.b16 %v499, %v497
    %v646 = vpack.c.b16 %v500, %v498
    %v647 = vpack.c.b16 %v503, %v501
    %v648 = vpack.c.b16 %v504, %v502
    %v649 = vpack.c.b16 %v507, %v505
    %v650 = vpack.c.b16 %v508, %v506
    %v651 = vpack.c.b16 %v511, %v509
    %v652 = vpack.c.b16 %v512, %v510
    %v653 = vpack.c.b16 %v515, %v513
    %v654 = vpack.c.b16 %v516, %v514
    %v655 = vpack.c.b16 %v519, %v517
    %v656 = vpack.c.b16 %v520, %v518
    %v657 = vpack.c.b16 %v523, %v521
    %v658 = vpack.c.b16 %v524, %v522
    %v659 = vpack.c.b16 %v527, %v525
    %v660 = vpack.c.b16 %v528, %v526
    %v661 = vpack.c.b16 %v531, %v529
    %v662 = vpack.c.b16 %v532, %v530
    %v663 = vpack.c.b16 %v535, %v533
    %v664 = vpack.c.b16 %v536, %v534
    %v665 = vpack.c.b16 %v539, %v537
    %v666 = vpack.c.b16 %v540, %v538
    %v667 = vpack.c.b16 %v543, %v541
    %v668 = vpack.c.b16 %v544, %v542
    %v669 = vpack.c.b16 %v547, %v545
    %v670 = vpack.c.b16 %v548, %v546
    %v671 = vpack.c.b16 %v551, %v549
    %v672 = vpack.c.b16 %v552, %v550
    %v673 = vpack.c.b16 %v555, %v553
    %v674 = vpack.c.b16 %v556, %v554
    %v675 = vpack.c.b16 %v559, %v557
    %v676 = vpack.c.b16 %v560, %v558
    %v677 = vpack.c.b16 %v563, %v561
    %v678 = vpack.c.b16 %v564, %v562
    %v679 = vpack.c.b16 %v567, %v565
    %v680 = vpack.c.b16 %v568, %v566
    %793 = vmatpush.bf16.msra.mxu0 %v583
    %794 = vmatpush.bf16.msra.mxu0 %v581
    %795 = vmatpush.bf16.msra.mxu0 %v579
    %796 = vmatpush.bf16.msra.mxu0 %v577
    %797 = vmatpush.bf16.msra.mxu0 %v575
    %798 = vmatpush.bf16.msra.mxu0 %v573
    %799 = vmatpush.bf16.msra.mxu0 %v571
    %800 = vmatpush.bf16.msra.mxu0 %v569
    %801 = vmatmul.bf16.gmra.mxu0 %v108
    %v802 = vpop.f32.mrf.mxu0
    %v803 = vadd.f32 %v229, %v802
    %v804 = vpop.f32.mrf.mxu0
    %805 = vdwg.mxu0
    %806 = vmatpush.bf16.msra.mxu0 %v599
    %807 = vmatpush.bf16.msra.mxu0 %v597
    %808 = vmatpush.bf16.msra.mxu0 %v595
    %809 = vmatpush.bf16.msra.mxu0 %v593
    %810 = vmatpush.bf16.msra.mxu0 %v591
    %811 = vmatpush.bf16.msra.mxu0 %v589
    %812 = vmatpush.bf16.msra.mxu0 %v587
    %813 = vmatpush.bf16.msra.mxu0 %v585
    %814 = vmatmul.bf16.gmra.mxu0 %v109
    %v815 = vpop.f32.mrf.mxu0
    %v816 = vadd.f32 %v803, %v815
    %v817 = vpop.f32.mrf.mxu0
    %818 = vdwg.mxu0
    %819 = vmatpush.bf16.msra.mxu0 %v615
    %820 = vmatpush.bf16.msra.mxu0 %v613
    %821 = vmatpush.bf16.msra.mxu0 %v611
    %822 = vmatpush.bf16.msra.mxu0 %v609
    %823 = vmatpush.bf16.msra.mxu0 %v607
    %824 = vmatpush.bf16.msra.mxu0 %v605
    %825 = vmatpush.bf16.msra.mxu0 %v603
    %826 = vmatpush.bf16.msra.mxu0 %v601
    %827 = vmatmul.bf16.gmra.mxu0 %v110
    %v828 = vpop.f32.mrf.mxu0
    %v829 = vadd.f32 %v816, %v828
    %v830 = vpop.f32.mrf.mxu0
    %831 = vdwg.mxu0
    %832 = vmatpush.bf16.msra.mxu0 %v631
    %833 = vmatpush.bf16.msra.mxu0 %v629
    %834 = vmatpush.bf16.msra.mxu0 %v627
    %835 = vmatpush.bf16.msra.mxu0 %v625
    %836 = vmatpush.bf16.msra.mxu0 %v623
    %837 = vmatpush.bf16.msra.mxu0 %v621
    %838 = vmatpush.bf16.msra.mxu0 %v619
    %839 = vmatpush.bf16.msra.mxu0 %v617
    %840 = vmatmul.bf16.gmra.mxu0 %v111
    %v841 = vpop.f32.mrf.mxu0
    %v842 = vadd.f32 %v829, %v841
    %v843 = vpop.f32.mrf.mxu0
    %844 = vdwg.mxu0
    %845 = vmatpush.bf16.msra.mxu0 %v647
    %846 = vmatpush.bf16.msra.mxu0 %v645
    %847 = vmatpush.bf16.msra.mxu0 %v643
    %848 = vmatpush.bf16.msra.mxu0 %v641
    %849 = vmatpush.bf16.msra.mxu0 %v639
    %850 = vmatpush.bf16.msra.mxu0 %v637
    %851 = vmatpush.bf16.msra.mxu0 %v635
    %852 = vmatpush.bf16.msra.mxu0 %v633
    %853 = vmatmul.bf16.gmra.mxu0 %v112
    %v854 = vpop.f32.mrf.mxu0
    %v855 = vadd.f32 %v842, %v854
    %v856 = vpop.f32.mrf.mxu0
    %857 = vdwg.mxu0
    %858 = vmatpush.bf16.msra.mxu0 %v663
    %859 = vmatpush.bf16.msra.mxu0 %v661
    %860 = vmatpush.bf16.msra.mxu0 %v659
    %861 = vmatpush.bf16.msra.mxu0 %v657
    %862 = vmatpush.bf16.msra.mxu0 %v655
    %863 = vmatpush.bf16.msra.mxu0 %v653
    %864 = vmatpush.bf16.msra.mxu0 %v651
    %865 = vmatpush.bf16.msra.mxu0 %v649
    %866 = vmatmul.bf16.gmra.mxu0 %v113
    %v867 = vpop.f32.mrf.mxu0
    %v868 = vadd.f32 %v855, %v867
    %v869 = vpop.f32.mrf.mxu0
    %870 = vdwg.mxu0
    %871 = vmatpush.bf16.msra.mxu0 %v679
    %872 = vmatpush.bf16.msra.mxu0 %v677
    %873 = vmatpush.bf16.msra.mxu0 %v675
    %874 = vmatpush.bf16.msra.mxu0 %v673
    %875 = vmatpush.bf16.msra.mxu0 %v671
    %876 = vmatpush.bf16.msra.mxu0 %v669
    %877 = vmatpush.bf16.msra.mxu0 %v667
    %878 = vmatpush.bf16.msra.mxu0 %v665
    %879 = vmatmul.bf16.gmra.mxu0 %v114
    %v880 = vpop.f32.mrf.mxu0
    %v881 = vadd.f32 %v868, %v880
    %v882 = vpop.f32.mrf.mxu0
    %883 = vdwg.mxu0
    %884 = vmatpush.bf16.msra.mxu0 %v584
    %885 = vmatpush.bf16.msra.mxu0 %v582
    %886 = vmatpush.bf16.msra.mxu0 %v580
    %887 = vmatpush.bf16.msra.mxu0 %v578
    %888 = vmatpush.bf16.msra.mxu0 %v576
    %889 = vmatpush.bf16.msra.mxu0 %v574
    %890 = vmatpush.bf16.msra.mxu0 %v572
    %891 = vmatpush.bf16.msra.mxu0 %v570
    %892 = vmatmul.bf16.gmra.mxu0 %v108
    %v893 = vpop.f32.mrf.mxu0
    %v894 = vadd.f32 %v230, %v893
    %v895 = vpop.f32.mrf.mxu0
    %896 = vdwg.mxu0
    %897 = vmatpush.bf16.msra.mxu0 %v600
    %898 = vmatpush.bf16.msra.mxu0 %v598
    %899 = vmatpush.bf16.msra.mxu0 %v596
    %900 = vmatpush.bf16.msra.mxu0 %v594
    %901 = vmatpush.bf16.msra.mxu0 %v592
    %902 = vmatpush.bf16.msra.mxu0 %v590
    %903 = vmatpush.bf16.msra.mxu0 %v588
    %904 = vmatpush.bf16.msra.mxu0 %v586
    %905 = vmatmul.bf16.gmra.mxu0 %v109
    %v906 = vpop.f32.mrf.mxu0
    %v907 = vadd.f32 %v894, %v906
    %v908 = vpop.f32.mrf.mxu0
    %909 = vdwg.mxu0
    %910 = vmatpush.bf16.msra.mxu0 %v616
    %911 = vmatpush.bf16.msra.mxu0 %v614
    %912 = vmatpush.bf16.msra.mxu0 %v612
    %913 = vmatpush.bf16.msra.mxu0 %v610
    %914 = vmatpush.bf16.msra.mxu0 %v608
    %915 = vmatpush.bf16.msra.mxu0 %v606
    %916 = vmatpush.bf16.msra.mxu0 %v604
    %917 = vmatpush.bf16.msra.mxu0 %v602
    %918 = vmatmul.bf16.gmra.mxu0 %v110
    %v919 = vpop.f32.mrf.mxu0
    %v920 = vadd.f32 %v907, %v919
    %v921 = vpop.f32.mrf.mxu0
    %922 = vdwg.mxu0
    %923 = vmatpush.bf16.msra.mxu0 %v632
    %924 = vmatpush.bf16.msra.mxu0 %v630
    %925 = vmatpush.bf16.msra.mxu0 %v628
    %926 = vmatpush.bf16.msra.mxu0 %v626
    %927 = vmatpush.bf16.msra.mxu0 %v624
    %928 = vmatpush.bf16.msra.mxu0 %v622
    %929 = vmatpush.bf16.msra.mxu0 %v620
    %930 = vmatpush.bf16.msra.mxu0 %v618
    %931 = vmatmul.bf16.gmra.mxu0 %v111
    %v932 = vpop.f32.mrf.mxu0
    %v933 = vadd.f32 %v920, %v932
    %v934 = vpop.f32.mrf.mxu0
    %935 = vdwg.mxu0
    %936 = vmatpush.bf16.msra.mxu0 %v648
    %937 = vmatpush.bf16.msra.mxu0 %v646
    %938 = vmatpush.bf16.msra.mxu0 %v644
    %939 = vmatpush.bf16.msra.mxu0 %v642
    %940 = vmatpush.bf16.msra.mxu0 %v640
    %941 = vmatpush.bf16.msra.mxu0 %v638
    %942 = vmatpush.bf16.msra.mxu0 %v636
    %943 = vmatpush.bf16.msra.mxu0 %v634
    %944 = vmatmul.bf16.gmra.mxu0 %v112
    %v945 = vpop.f32.mrf.mxu0
    %v946 = vadd.f32 %v933, %v945
    %v947 = vpop.f32.mrf.mxu0
    %948 = vdwg.mxu0
    %949 = vmatpush.bf16.msra.mxu0 %v664
    %950 = vmatpush.bf16.msra.mxu0 %v662
    %951 = vmatpush.bf16.msra.mxu0 %v660
    %952 = vmatpush.bf16.msra.mxu0 %v658
    %953 = vmatpush.bf16.msra.mxu0 %v656
    %954 = vmatpush.bf16.msra.mxu0 %v654
    %955 = vmatpush.bf16.msra.mxu0 %v652
    %956 = vmatpush.bf16.msra.mxu0 %v650
    %957 = vmatmul.bf16.gmra.mxu0 %v113
    %v958 = vpop.f32.mrf.mxu0
    %v959 = vadd.f32 %v946, %v958
    %v960 = vpop.f32.mrf.mxu0
    %961 = vdwg.mxu0
    %962 = vmatpush.bf16.msra.mxu0 %v680
    %963 = vmatpush.bf16.msra.mxu0 %v678
    %964 = vmatpush.bf16.msra.mxu0 %v676
    %965 = vmatpush.bf16.msra.mxu0 %v674
    %966 = vmatpush.bf16.msra.mxu0 %v672
    %967 = vmatpush.bf16.msra.mxu0 %v670
    %968 = vmatpush.bf16.msra.mxu0 %v668
    %969 = vmatpush.bf16.msra.mxu0 %v666
    %970 = vmatmul.bf16.gmra.mxu0 %v114
    %v971 = vpop.f32.mrf.mxu0
    %v972 = vadd.f32 %v959, %v971
    %v973 = vpop.f32.mrf.mxu0
    %974 = vdwg.mxu0
    %v975 = vmax.f32 %v881, 0.0
    %v976 = vmax.f32 %v972, 0.0
    %v977 = vpack.c.bf16 %v975, %v975
    %v978 = vpack.c.bf16 %v976, %v976
    %v979 = vld [vmem:[#allocation8] sm:$0xf]
    %v980 = vld [vmem:[#allocation8 + $0x4] sm:$0xf]
    %v981 = vld [vmem:[#allocation8 + $0x8] sm:$0xf]
    %v982 = vld [vmem:[#allocation8 + $0xc] sm:$0xf]
    %v983 = vld [vmem:[#allocation8 + $0x10] sm:$0xf]
    %v984 = vld [vmem:[#allocation8 + $0x14] sm:$0xf]
    %v985 = vld [vmem:[#allocation8 + $0x18] sm:$0xf]
    %v986 = vld [vmem:[#allocation8 + $0x1c] sm:$0xf]
    %v987 = vld [vmem:[#allocation8 + $0x20] sm:$0xf]
    %v988 = vld [vmem:[#allocation8 + $0x24] sm:$0xf]
    %v989 = vld [vmem:[#allocation8 + $0x28] sm:$0xf]
    %v990 = vld [vmem:[#allocation8 + $0x2c] sm:$0xf]
    %v991 = vld [vmem:[#allocation8 + $0x30] sm:$0xf]
    %v992 = vld [vmem:[#allocation8 + $0x34] sm:$0xf]
    %v993 = vld [vmem:[#allocation8 + $0x38] sm:$0xf]
    %v994 = vld [vmem:[#allocation8 + $0x3c] sm:$0xf]
    %v995 = vld [vmem:[#allocation8 + $0x40] sm:$0xf]
    %v996 = vld [vmem:[#allocation8 + $0x44] sm:$0xf]
    %v997 = vld [vmem:[#allocation8 + $0x48] sm:$0xf]
    %v998 = vld [vmem:[#allocation8 + $0x4c] sm:$0xf]
    %v999 = vld [vmem:[#allocation8 + $0x50] sm:$0xf]
    %v1000 = vld [vmem:[#allocation8 + $0x54] sm:$0xf]
    %v1001 = vld [vmem:[#allocation8 + $0x58] sm:$0xf]
    %v1002 = vld [vmem:[#allocation8 + $0x5c] sm:$0xf]
    %v1003 = vld [vmem:[#allocation8 + $0x60] sm:$0xf]
    %v1004 = vld [vmem:[#allocation8 + $0x64] sm:$0xf]
    %v1005 = vld [vmem:[#allocation8 + $0x68] sm:$0xf]
    %v1006 = vld [vmem:[#allocation8 + $0x6c] sm:$0xf]
    %v1007 = vld [vmem:[#allocation8 + $0x70] sm:$0xf]
    %v1008 = vld [vmem:[#allocation8 + $0x74] sm:$0xf]
    %v1009 = vld [vmem:[#allocation8 + $0x78] sm:$0xf]
    %v1010 = vld [vmem:[#allocation8 + $0x7c] sm:$0xf]
    %v1011 = vld [vmem:[%s4] sm:$0x1]
    %v1013 = vperm.slane %v1011, 0
    %v1047 = vunpack.c.l.b16 %v979
    %v1048 = vunpack.c.l.b16 %v980
    %v1049 = vunpack.c.l.b16 %v981
    %v1050 = vunpack.c.l.b16 %v982
    %v1051 = vunpack.c.l.b16 %v983
    %v1052 = vunpack.c.l.b16 %v984
    %v1053 = vunpack.c.l.b16 %v985
    %v1054 = vunpack.c.l.b16 %v986
    %v1055 = vunpack.c.l.b16 %v987
    %v1056 = vunpack.c.l.b16 %v988
    %v1057 = vunpack.c.l.b16 %v989
    %v1058 = vunpack.c.l.b16 %v990
    %v1059 = vunpack.c.l.b16 %v991
    %v1060 = vunpack.c.l.b16 %v992
    %v1061 = vunpack.c.l.b16 %v993
    %v1062 = vunpack.c.l.b16 %v994
    %v1063 = vunpack.c.l.b16 %v995
    %v1064 = vunpack.c.l.b16 %v996
    %v1065 = vunpack.c.l.b16 %v997
    %v1066 = vunpack.c.l.b16 %v998
    %v1067 = vunpack.c.l.b16 %v999
    %v1068 = vunpack.c.l.b16 %v1000
    %v1069 = vunpack.c.l.b16 %v1001
    %v1070 = vunpack.c.l.b16 %v1002
    %v1071 = vunpack.c.l.b16 %v1003
    %v1072 = vunpack.c.l.b16 %v1004
    %v1073 = vunpack.c.l.b16 %v1005
    %v1074 = vunpack.c.l.b16 %v1006
    %v1075 = vunpack.c.l.b16 %v1007
    %v1076 = vunpack.c.l.b16 %v1008
    %v1077 = vunpack.c.l.b16 %v1009
    %v1078 = vunpack.c.l.b16 %v1010
    %v1079 = vpack.c.b16 %v1048, %v1047
    %v1080 = vpack.c.b16 %v1050, %v1049
    %v1081 = vpack.c.b16 %v1052, %v1051
    %v1082 = vpack.c.b16 %v1054, %v1053
    %v1083 = vpack.c.b16 %v1056, %v1055
    %v1084 = vpack.c.b16 %v1058, %v1057
    %v1085 = vpack.c.b16 %v1060, %v1059
    %v1086 = vpack.c.b16 %v1062, %v1061
    %v1087 = vpack.c.b16 %v1064, %v1063
    %v1088 = vpack.c.b16 %v1066, %v1065
    %v1089 = vpack.c.b16 %v1068, %v1067
    %v1090 = vpack.c.b16 %v1070, %v1069
    %v1091 = vpack.c.b16 %v1072, %v1071
    %v1092 = vpack.c.b16 %v1074, %v1073
    %v1093 = vpack.c.b16 %v1076, %v1075
    %v1094 = vpack.c.b16 %v1078, %v1077
    %1111 = vmatpush.bf16.msra.mxu0 %v1086
    %1112 = vmatpush.bf16.msra.mxu0 %v1085
    %1113 = vmatpush.bf16.msra.mxu0 %v1084
    %1114 = vmatpush.bf16.msra.mxu0 %v1083
    %1115 = vmatpush.bf16.msra.mxu0 %v1082
    %1116 = vmatpush.bf16.msra.mxu0 %v1081
    %1117 = vmatpush.bf16.msra.mxu0 %v1080
    %1118 = vmatpush.bf16.msra.mxu0 %v1079
    %1119 = vmatmul.bf16.gmra.mxu0 %v977
    %v1120 = vpop.f32.mrf.mxu0
    %v1121 = vadd.f32 %v1013, %v1120
    %v1122 = vpop.f32.mrf.mxu0
    %1123 = vdwg.mxu0
    %1124 = vmatpush.bf16.msra.mxu0 %v1094
    %1125 = vmatpush.bf16.msra.mxu0 %v1093
    %1126 = vmatpush.bf16.msra.mxu0 %v1092
    %1127 = vmatpush.bf16.msra.mxu0 %v1091
    %1128 = vmatpush.bf16.msra.mxu0 %v1090
    %1129 = vmatpush.bf16.msra.mxu0 %v1089
    %1130 = vmatpush.bf16.msra.mxu0 %v1088
    %1131 = vmatpush.bf16.msra.mxu0 %v1087
    %1132 = vmatmul.bf16.gmra.mxu0 %v978
    %v1133 = vpop.f32.mrf.mxu0
    %v1134 = vadd.f32 %v1121, %v1133
    %v1135 = vpop.f32.mrf.mxu0
    %1136 = vdwg.mxu0
    %v1137 = vmax.f32 %v1134, 0.0
    %v1138 = vpack.c.bf16 %v1137, %v1137
    %v1139 = vld [vmem:[#allocation10] sm:$0xf]
    %v1140 = vld [vmem:[#allocation10 + $0x4] sm:$0xf]
    %v1141 = vld [vmem:[#allocation10 + $0x8] sm:$0xf]
    %v1142 = vld [vmem:[#allocation10 + $0xc] sm:$0xf]
    %v1143 = vld [vmem:[#allocation10 + $0x10] sm:$0xf]
    %v1144 = vld [vmem:[#allocation10 + $0x14] sm:$0xf]
    %v1145 = vld [vmem:[#allocation10 + $0x18] sm:$0xf]
    %v1146 = vld [vmem:[#allocation10 + $0x1c] sm:$0xf]
    %v1147 = vld [vmem:[#allocation10 + $0x20] sm:$0xf]
    %v1148 = vld [vmem:[#allocation10 + $0x24] sm:$0xf]
    %v1149 = vld [vmem:[#allocation10 + $0x28] sm:$0xf]
    %v1150 = vld [vmem:[#allocation10 + $0x2c] sm:$0xf]
    %v1151 = vld [vmem:[#allocation10 + $0x30] sm:$0xf]
    %v1152 = vld [vmem:[#allocation10 + $0x34] sm:$0xf]
    %v1153 = vld [vmem:[#allocation10 + $0x38] sm:$0xf]
    %v1154 = vld [vmem:[#allocation10 + $0x3c] sm:$0xf]
    %v1155 = vld [vmem:[%s6] sm:$0x1]
    %v1157 = vperm.slane %v1155, 0
    %v1175 = vunpack.c.l.b16 %v1139
    %v1176 = vunpack.c.l.b16 %v1140
    %v1177 = vunpack.c.l.b16 %v1141
    %v1178 = vunpack.c.l.b16 %v1142
    %v1179 = vunpack.c.l.b16 %v1143
    %v1180 = vunpack.c.l.b16 %v1144
    %v1181 = vunpack.c.l.b16 %v1145
    %v1182 = vunpack.c.l.b16 %v1146
    %v1183 = vunpack.c.l.b16 %v1147
    %v1184 = vunpack.c.l.b16 %v1148
    %v1185 = vunpack.c.l.b16 %v1149
    %v1186 = vunpack.c.l.b16 %v1150
    %v1187 = vunpack.c.l.b16 %v1151
    %v1188 = vunpack.c.l.b16 %v1152
    %v1189 = vunpack.c.l.b16 %v1153
    %v1190 = vunpack.c.l.b16 %v1154
    %v1191 = vpack.c.b16 %v1176, %v1175
    %v1192 = vpack.c.b16 %v1178, %v1177
    %v1193 = vpack.c.b16 %v1180, %v1179
    %v1194 = vpack.c.b16 %v1182, %v1181
    %v1195 = vpack.c.b16 %v1184, %v1183
    %v1196 = vpack.c.b16 %v1186, %v1185
    %v1197 = vpack.c.b16 %v1188, %v1187
    %v1198 = vpack.c.b16 %v1190, %v1189
    %1207 = vmatpush.bf16.msra.mxu0 %v1198
    %1208 = vmatpush.bf16.msra.mxu0 %v1197
    %1209 = vmatpush.bf16.msra.mxu0 %v1196
    %1210 = vmatpush.bf16.msra.mxu0 %v1195
    %1211 = vmatpush.bf16.msra.mxu0 %v1194
    %1212 = vmatpush.bf16.msra.mxu0 %v1193
    %1213 = vmatpush.bf16.msra.mxu0 %v1192
    %1214 = vmatpush.bf16.msra.mxu0 %v1191
    %1215 = vmatmul.bf16.gmra.mxu0 %v1138
    %v1216 = vpop.f32.mrf.mxu0
    %v1217 = vadd.f32 %v1157, %v1216
    %v1218 = vpop.f32.mrf.mxu0
    %1219 = vdwg.mxu0
    %1220 = vst [vmem:[#allocation11] sm:$0xff] %v1217
    // Predicated region
    $region50: #{tpu_custom_call.1} parent=1 // pred_check
      _
    $region51: #{tpu_custom_call.1} parent=1 // pred_check_branch
      %1222 = sbr.rel (0) target = $region53
    $region52: #{tpu_custom_call.1} parent=1 // pred_region
      %1224 = vsyncadd [#allocation4], 0
      %s1226 = sshll.u32 [#allocation11], 4
      %s1227 = int_to_ptr.vmem [resolvable:$true] %s1226
      %s1228 = sshll.u32 %s7, 4
      %s1229 = int_to_ptr.hbm [resolvable:$true] %s1228
      %1231 = dma.vmem_to_hbm [thread:$0]  %s1227, 128, %s1229, [#allocation4]
    $region53: #{tpu_custom_call.1} parent=1 // pred_fallthru
      _
    // Predicated region
    $region54: #{tpu_custom_call.1} parent=1 // pred_check
      _
    $region55: #{tpu_custom_call.1} parent=1 // pred_check_branch
      %1233 = sbr.rel (0) target = $region57
    $region56: #{tpu_custom_call.1} parent=1 // pred_region
      %1235 = dma.done [#allocation4], 128
    $region57: #{tpu_custom_call.1} parent=1 // pred_fallthru
      _
    %1236 = vsyncpa [#allocation3], 1
    %1237 = vsyncpa [#allocation6], 1
    %1238 = vsyncpa [#allocation9], 1
    %1239 = vsyncpa [#allocation4], 1

</llo_original>
